<compile_context>
chip_gen: v6e
topology: v6e:2x2x1
jax: 0.10.0
libtpu: 0.0.40
codegen_flags: <defaults>
</compile_context>

<pallas_src>
import functools

import jax
import jax.numpy as jnp
from jax.experimental import pallas as pl
from jax.experimental.pallas import tpu as pltpu


def _cnn_kernel(x_ref, w_ref, b_ref, o_ref, *, bt, l_pad):
    # x_ref: (bt*l_pad, k*Cin)  im2col rows for bt batch elements
    # w_ref: (k*Cin, CoutP)     flattened conv taps, lane-padded to 128
    # b_ref: (1, CoutP)         bias (lane-padded)
    # o_ref: (bt, CoutP)        per-sample max over positions of relu(conv)
    acc = jnp.dot(x_ref[...], w_ref[...], preferred_element_type=jnp.float32)
    # Regroup rows to (bt, l_pad, CoutP). l_pad % 8 == 0 and CoutP % 128 == 0,
    # so this reshape is tile-aligned (no data shuffling across (8,128) tiles).
    acc = acc.reshape(bt, l_pad, acc.shape[-1])
    mx = jnp.max(acc, axis=1)                                   # max over L
    # bias constant along L + ReLU monotone  =>  relu(max + b) == max(relu(.+b))
    out = jnp.maximum(mx + b_ref[...].astype(jnp.float32), 0.0)
    o_ref[...] = out.astype(o_ref.dtype)


def cnn_forward(x, weight, bias, *, k=5, padding=1, block_batch=128,
                matmul_dtype=None):
    """x: (B, L, C_in) channels-last activations (i.e. the PyTorch x_reshaped);
    weight: (C_out, C_in, k) PyTorch Conv1d layout; bias: (C_out,).
    Returns (B, C_out) = adaptive_max_pool1d(relu(conv1d(x^T))).squeeze(-1)."""
    B, L, Cin = x.shape
    Cout = weight.shape[0]
    l_out = L + 2 * padding - k + 1
    assert l_out >= 1
    kc = k * Cin

    # ---- plain-JAX glue: pad, im2col, weight flatten, lane/sublane padding ----
    x_pad = jnp.pad(x, ((0, 0), (padding, padding), (0, 0)))      # (B, Lp, Cin)
    # im2col: tap j occupies channels [j*Cin, (j+1)*Cin)  -> (B, l_out, k*Cin)
    cols = jnp.concatenate([x_pad[:, j:j + l_out, :] for j in range(k)], axis=-1)

    # Pad positions to a multiple of 8 with *edge* rows (copies of the last
    # valid position) so the in-kernel max is unchanged and needs no mask.
    l_pad = ((l_out + 7) // 8) * 8
    if l_pad != l_out:
        cols = jnp.pad(cols, ((0, 0), (0, l_pad - l_out), (0, 0)), mode="edge")

    # Batch tiling: fold B into the matmul M dimension, bt elements per step.
    bt = min(block_batch, B)
    if bt < B:
        bt = max(8, (bt // 8) * 8)        # multi-step -> sublane-aligned tiles
    b_padded = ((B + bt - 1) // bt) * bt
    if b_padded != B:
        cols = jnp.pad(cols, ((0, b_padded - B), (0, 0), (0, 0)))

    # Lane-pad Cout to a multiple of 128: full-lane matmul N + unmasked stores.
    cout_p = ((Cout + 127) // 128) * 128
    w_flat = jnp.transpose(weight, (2, 1, 0)).reshape(kc, Cout)    # (k*Cin, Cout)
    w_flat = jnp.pad(w_flat, ((0, 0), (0, cout_p - Cout)))
    b_row = jnp.pad(bias, (0, cout_p - Cout)).reshape(1, cout_p)

    if matmul_dtype is not None:          # e.g. jnp.bfloat16 on v6e / v7x
        cols = cols.astype(matmul_dtype)
        w_flat = w_flat.astype(matmul_dtype)

    cols2d = cols.reshape(b_padded * l_pad, kc)                    # M = B*l_pad
    n_steps = b_padded // bt

    kernel = functools.partial(_cnn_kernel, bt=bt, l_pad=l_pad)
    out = pl.pallas_call(
        kernel,
        out_shape=jax.ShapeDtypeStruct((b_padded, cout_p), x.dtype),
        grid_spec=pltpu.PrefetchScalarGridSpec(
            num_scalar_prefetch=0,
            grid=(n_steps,),
            in_specs=[
                pl.BlockSpec((bt * l_pad, kc), lambda i: (i, 0)),
                pl.BlockSpec((kc, cout_p), lambda i: (0, 0)),   # VMEM-resident
                pl.BlockSpec((1, cout_p), lambda i: (0, 0)),
            ],
            out_specs=pl.BlockSpec((bt, cout_p), lambda i: (i, 0)),
        ),
        compiler_params=pltpu.CompilerParams(
            dimension_semantics=("parallel",) if n_steps > 1 else ("arbitrary",),
        ),
    )(cols2d, w_flat, b_row)

    return out[:B, :Cout]


def _reference(x, weight, bias, *, k=5, padding=1):
    # Pure-JAX reference mirroring the PyTorch forward (for a sanity check).
    B, L, Cin = x.shape
    Cout = weight.shape[0]
    l_out = L + 2 * padding - k + 1
    x_pad = jnp.pad(x, ((0, 0), (padding, padding), (0, 0)))
    conv = jnp.zeros((B, l_out, Cout), jnp.float32)
    w_kcc = jnp.transpose(weight, (2, 1, 0))
    for j in range(k):
        conv = conv + jnp.einsum(
            "blc,cf->blf", x_pad[:, j : j + l_out, :], w_kcc[j]
        )
    conv = conv + bias[None, None, :]
    return jnp.max(jax.nn.relu(conv), axis=1)


if __name__ == "__main__":
    # Small shapes consistent with the module: batch=2, word length=16,
    # e_char_size=32, num_filters=64, k=5, padding=1.
    B, L, E_CHAR, NUM_FILTERS, K, PAD = 2, 16, 32, 64, 5, 1

    key = jax.random.PRNGKey(0)
    kx, kw, kb = jax.random.split(key, 3)
    x = jax.random.normal(kx, (B, L, E_CHAR), dtype=jnp.float32)
    # Deterministic parameters (PyTorch Conv1d weight layout: (Cout, Cin, k)).
    weight = jax.random.normal(kw, (NUM_FILTERS, E_CHAR, K), dtype=jnp.float32) * 0.1
    bias = jax.random.normal(kb, (NUM_FILTERS,), dtype=jnp.float32) * 0.1

    out = cnn_forward(x, weight, bias, k=K, padding=PAD)
    out = jax.block_until_ready(out)

    ref = _reference(x, weight, bias, k=K, padding=PAD)
    assert out.shape == (B, NUM_FILTERS)
    assert jnp.allclose(out, ref, atol=1e-4, rtol=1e-4)

    print("KERNEL_OK")
</pallas_src>

<mosaic_0001>
module attributes {stable_mosaic.version = 11 : i64} {
  func.func @_cnn_kernel(%arg0: i32, %arg1: memref<32x160xf32, #tpu.memory_space<vmem>>, %arg2: memref<160x128xf32, #tpu.memory_space<vmem>>, %arg3: memref<1x128xf32, #tpu.memory_space<vmem>>, %arg4: memref<2x128xf32, #tpu.memory_space<vmem>>) attributes {dimension_semantics = [#tpu.dimension_semantics<arbitrary>], iteration_bounds = array<i64: 1>, scalar_prefetch = 0 : i64, scratch_operands = 0 : i64, tpu.core_type = #tpu.core_type<tc>, window_params = [{transform_indices = @transform_0, window_bounds = array<i64: 32, 160>}, {pipeline_mode = #tpu.pipeline_mode<synchronous>, transform_indices = @transform_1, window_bounds = array<i64: 160, 128>}, {pipeline_mode = #tpu.pipeline_mode<synchronous>, transform_indices = @transform_2, window_bounds = array<i64: 1, 128>}, {transform_indices = @transform_3, window_bounds = array<i64: 2, 128>}]} {
    %c0 = arith.constant 0 : index
    %c0_0 = arith.constant 0 : index
    %0 = vector.load %arg1[%c0, %c0_0] : memref<32x160xf32, #tpu.memory_space<vmem>>, vector<32x160xf32>
    %c0_1 = arith.constant 0 : index
    %c0_2 = arith.constant 0 : index
    %1 = vector.load %arg2[%c0_1, %c0_2] : memref<160x128xf32, #tpu.memory_space<vmem>>, vector<160x128xf32>
    %cst = arith.constant dense<0.000000e+00> : vector<32x128xf32>
    %2 = tpu.matmul %0, %1, %cst {dimension_numbers = #tpu.dot_dimension_numbers<[1], [0], [0], [1], [0, 0, 1, 1], [], []>} : vector<32x160xf32>, vector<160x128xf32>, vector<32x128xf32> -> vector<32x128xf32>
    %3 = vector.shape_cast %2 : vector<32x128xf32> to vector<2x16x128xf32>
    %cst_3 = arith.constant dense<0xFF800000> : vector<2x128xf32>
    %4 = vector.multi_reduction <maximumf>, %3, %cst_3 [1] : vector<2x16x128xf32> to vector<2x128xf32>
    %c0_4 = arith.constant 0 : index
    %c0_5 = arith.constant 0 : index
    %5 = vector.load %arg3[%c0_4, %c0_5] : memref<1x128xf32, #tpu.memory_space<vmem>>, vector<1x128xf32>
    %6 = vector.broadcast %5 : vector<1x128xf32> to vector<2x128xf32>
    %7 = arith.addf %4, %6 : vector<2x128xf32>
    %cst_6 = arith.constant 0.000000e+00 : f32
    %8 = vector.broadcast %cst_6 : f32 to vector<2x128xf32>
    %9 = arith.maximumf %7, %8 : vector<2x128xf32>
    %c0_7 = arith.constant 0 : index
    %c0_8 = arith.constant 0 : index
    %10 = vector.load %arg4[%c0_7, %c0_8] : memref<2x128xf32, #tpu.memory_space<vmem>>, vector<2x128xf32>
    tpu.vector_store %arg4[%c0_7, %c0_8], %9 {strides = array<i32>} : memref<2x128xf32, #tpu.memory_space<vmem>>, vector<2x128xf32>,
    return
  }
  func.func @transform_0(%arg0: i32) -> (i32, i32) {
    %c0_i32 = arith.constant 0 : i32
    %c0_i32_0 = arith.constant 0 : i32
    return %arg0, %c0_i32 : i32, i32
  }
  func.func @transform_1(%arg0: i32) -> (i32, i32) {
    %c0_i32 = arith.constant 0 : i32
    %c0_i32_0 = arith.constant 0 : i32
    %c0_i32_1 = arith.constant 0 : i32
    return %c0_i32, %c0_i32_0 : i32, i32
  }
  func.func @transform_2(%arg0: i32) -> (i32, i32) {
    %c0_i32 = arith.constant 0 : i32
    %c0_i32_0 = arith.constant 0 : i32
    %c0_i32_1 = arith.constant 0 : i32
    return %c0_i32, %c0_i32_0 : i32, i32
  }
  func.func @transform_3(%arg0: i32) -> (i32, i32) {
    %c0_i32 = arith.constant 0 : i32
    %c0_i32_0 = arith.constant 0 : i32
    return %arg0, %c0_i32 : i32, i32
  }
}

</mosaic_0001>

<llo_original>
// kernel: tpu_custom_call.1
$region0: #{tpu_custom_call.1}
  #allocation0 [shape = 'u32[]', space=smem, size = 0x4, offset = 0x4, fixed_abs, tag = 'smem constant byte address 0x4 - core index']
  #allocation1 [shape = 'u32[144,128]{1,0:T(1,128)}', space=vmem, size = 0x12000, scoped, tag = 'internal scratch']
  %s0 = inlined_call_operand.hbm [shape: f32[32,160], index: 0, kind: input, shape index: {}]
  %s1 = inlined_call_operand.hbm [shape: f32[160,128], index: 1, kind: input, shape index: {}]
  %s2 = inlined_call_operand.vmem [shape: f32[1,128], index: 2, kind: input, shape index: {}]
  %s3 = inlined_call_operand.hbm [shape: f32[2,128], index: 3, kind: output, shape index: {}]
  %s4 = sld [smem:[#allocation0]]
  $region30: #{tpu_custom_call.1} parent=0
    _
  %s6 = ssub.s32 1, %s4
  %s7 = scalar_select 0, %s6, %s4
  $region1: #{tpu_custom_call.1} parent=0
    #allocation2 [shape = 'u8[32768]{0}', space=vmem, size = 0x8000, scoped, tag = 'input window, operand 0, single buffered']
    #allocation3 [shape = 's32[1]{0}', space=sflag, size = 0x4, scoped, tag = 'scoped memory for tpu_custom_call.1']
    #allocation4 [shape = 's32[1]{0}', space=sflag, size = 0x4, scoped, tag = 'scoped memory for tpu_custom_call.1']
    #allocation5 [shape = 'u8[81920]{0}', space=vmem, size = 0x14000, scoped, tag = 'input window, operand 1, single buffered']
    #allocation6 [shape = 's32[1]{0}', space=sflag, size = 0x4, scoped, tag = 'scoped memory for tpu_custom_call.1']
    #allocation7 [shape = 'u8[1024]{0}', space=vmem, size = 0x400, scoped, tag = 'output window, operand 0, single buffered']
    %8 = vsyncpa [#allocation3], 0
    %9 = vsyncpa [#allocation6], 0
    %10 = vsyncpa [#allocation4], 0
    // Predicated region
    $region2: #{tpu_custom_call.1} parent=1 // pred_check
      _
    $region3: #{tpu_custom_call.1} parent=1 // pred_check_branch
      %12 = sbr.rel (0) target = $region5
    $region4: #{tpu_custom_call.1} parent=1 // pred_region
      %s14 = ssub.s32 1024, 1024
      %15 = vsyncadd [#allocation3], %s14
      %s16 = sshll.u32 [#allocation2], 4
      %s17 = int_to_ptr.vmem [resolvable:$true] %s16
      %22 = dma.hbm_to_vmem [thread:$0]  %s0, 1024, %s17, [#allocation3], 256, 256, 16
    $region5: #{tpu_custom_call.1} parent=1 // pred_fallthru
      _
    // Predicated region
    $region6: #{tpu_custom_call.1} parent=1 // pred_check
      _
    $region7: #{tpu_custom_call.1} parent=1 // pred_check_branch
      %24 = sbr.rel (0) target = $region9
    $region8: #{tpu_custom_call.1} parent=1 // pred_region
      %s26 = ssub.s32 2560, 2560
      %27 = vsyncadd [#allocation6], %s26
      %s28 = sshll.u32 [#allocation5], 4
      %s29 = int_to_ptr.vmem [resolvable:$true] %s28
      %34 = dma.hbm_to_vmem [thread:$0]  %s1, 2560, %s29, [#allocation6], 128, 128, 8
    $region9: #{tpu_custom_call.1} parent=1 // pred_fallthru
      _
    // Predicated region
    $region10: #{tpu_custom_call.1} parent=1 // pred_check
      _
    $region11: #{tpu_custom_call.1} parent=1 // pred_check_branch
      %36 = sbr.rel (0) target = $region13
    $region12: #{tpu_custom_call.1} parent=1 // pred_region
      _
    $region13: #{tpu_custom_call.1} parent=1 // pred_fallthru
      _
    // Predicated region
    $region14: #{tpu_custom_call.1} parent=1 // pred_check
      _
    $region15: #{tpu_custom_call.1} parent=1 // pred_check_branch
      %38 = sbr.rel (0) target = $region17
    $region16: #{tpu_custom_call.1} parent=1 // pred_region
      %39 = dma.done [#allocation3], 1024
    $region17: #{tpu_custom_call.1} parent=1 // pred_fallthru
      _
    // Predicated region
    $region18: #{tpu_custom_call.1} parent=1 // pred_check
      _
    $region19: #{tpu_custom_call.1} parent=1 // pred_check_branch
      %41 = sbr.rel (0) target = $region21
    $region20: #{tpu_custom_call.1} parent=1 // pred_region
      %42 = dma.done [#allocation6], 2560
    $region21: #{tpu_custom_call.1} parent=1 // pred_fallthru
      _
    %v43 = vld [vmem:[#allocation2] sm:$0xff]
    %v44 = vld [vmem:[#allocation2 + $0x8] sm:$0xff]
    %v45 = vld [vmem:[#allocation2 + $0x10] sm:$0xff]
    %v46 = vld [vmem:[#allocation2 + $0x18] sm:$0xff]
    %v47 = vld [vmem:[#allocation2 + $0x20] sm:$0xff]
    %v48 = vld [vmem:[#allocation2 + $0x28] sm:$0xff]
    %v49 = vld [vmem:[#allocation2 + $0x30] sm:$0xff]
    %v50 = vld [vmem:[#allocation2 + $0x38] sm:$0xff]
    %v51 = vld [vmem:[#allocation5] sm:$0xff]
    %v52 = vld [vmem:[#allocation5 + $0x8] sm:$0xff]
    %v53 = vld [vmem:[#allocation5 + $0x10] sm:$0xff]
    %v54 = vld [vmem:[#allocation5 + $0x18] sm:$0xff]
    %v55 = vld [vmem:[#allocation5 + $0x20] sm:$0xff]
    %v56 = vld [vmem:[#allocation5 + $0x28] sm:$0xff]
    %v57 = vld [vmem:[#allocation5 + $0x30] sm:$0xff]
    %v58 = vld [vmem:[#allocation5 + $0x38] sm:$0xff]
    %v59 = vld [vmem:[#allocation5 + $0x40] sm:$0xff]
    %v60 = vld [vmem:[#allocation5 + $0x48] sm:$0xff]
    %v61 = vld [vmem:[#allocation5 + $0x50] sm:$0xff]
    %v62 = vld [vmem:[#allocation5 + $0x58] sm:$0xff]
    %v63 = vld [vmem:[#allocation5 + $0x60] sm:$0xff]
    %v64 = vld [vmem:[#allocation5 + $0x68] sm:$0xff]
    %v65 = vld [vmem:[#allocation5 + $0x70] sm:$0xff]
    %v66 = vld [vmem:[#allocation5 + $0x78] sm:$0xff]
    %v67 = vld [vmem:[#allocation5 + $0x80] sm:$0xff]
    %v68 = vld [vmem:[#allocation5 + $0x88] sm:$0xff]
    %v69 = vld [vmem:[#allocation5 + $0x90] sm:$0xff]
    %v70 = vld [vmem:[#allocation5 + $0x98] sm:$0xff]
    %vm71 = vcmask 261120
    %v73 = vsel %vm71, %v44, 0
    %v76 = vsel %vm71, %v46, 0
    %v79 = vsel %vm71, %v48, 0
    %v82 = vsel %vm71, %v50, 0
    %84 = vmatprep.subr.mxu0 0.0
    %85 = vmatpush1.msra.mxu0 %v66
    %86 = vmatprep.subr.mxu0 0.0
    %87 = vmatpush1.msra.mxu0 %v65
    %88 = vmatprep.subr.mxu0 0.0
    %89 = vmatpush1.msra.mxu0 %v64
    %90 = vmatprep.subr.mxu0 0.0
    %91 = vmatpush1.msra.mxu0 %v63
    %92 = vmatprep.subr.mxu0 0.0
    %93 = vmatpush1.msra.mxu0 %v62
    %94 = vmatprep.subr.mxu0 0.0
    %95 = vmatpush1.msra.mxu0 %v61
    %96 = vmatprep.subr.mxu0 0.0
    %97 = vmatpush1.msra.mxu0 %v60
    %98 = vmatprep.subr.mxu0 0.0
    %99 = vmatpush1.msra.mxu0 %v59
    %100 = vmatprep.subr.mxu0 0.0
    %101 = vmatpush1.msra.mxu0 %v58
    %102 = vmatprep.subr.mxu0 0.0
    %103 = vmatpush1.msra.mxu0 %v57
    %104 = vmatprep.subr.mxu0 0.0
    %105 = vmatpush1.msra.mxu0 %v56
    %106 = vmatprep.subr.mxu0 0.0
    %107 = vmatpush1.msra.mxu0 %v55
    %108 = vmatprep.subr.mxu0 0.0
    %109 = vmatpush1.msra.mxu0 %v54
    %110 = vmatprep.subr.mxu0 0.0
    %111 = vmatpush1.msra.mxu0 %v53
    %112 = vmatprep.subr.mxu0 0.0
    %113 = vmatpush1.msra.mxu0 %v52
    %114 = vmatprep.subr.mxu0 0.0
    %115 = vmatpush1.msra.mxu0 %v51
    %116 = vmatprep.subr.mxu0 0.0
    %117 = vmatpush2.msra.mxu0 0.0
    %118 = vmatprep.subr.mxu0 0.0
    %119 = vmatpush2.msra.mxu0 0.0
    %120 = vmatprep.subr.mxu0 0.0
    %121 = vmatpush2.msra.mxu0 0.0
    %122 = vmatprep.subr.mxu0 0.0
    %123 = vmatpush2.msra.mxu0 0.0
    %124 = vmatprep.subr.mxu0 0.0
    %125 = vmatpush2.msra.mxu0 0.0
    %126 = vmatprep.subr.mxu0 0.0
    %127 = vmatpush2.msra.mxu0 0.0
    %128 = vmatprep.subr.mxu0 0.0
    %129 = vmatpush2.msra.mxu0 0.0
    %130 = vmatprep.subr.mxu0 0.0
    %131 = vmatpush2.msra.mxu0 0.0
    %132 = vmatprep.subr.mxu0 0.0
    %133 = vmatpush2.msra.mxu0 0.0
    %134 = vmatprep.subr.mxu0 0.0
    %135 = vmatpush2.msra.mxu0 0.0
    %136 = vmatprep.subr.mxu0 0.0
    %137 = vmatpush2.msra.mxu0 0.0
    %138 = vmatprep.subr.mxu0 0.0
    %139 = vmatpush2.msra.mxu0 0.0
    %140 = vmatprep.subr.mxu0 0.0
    %141 = vmatpush2.msra.mxu0 %v70
    %142 = vmatprep.subr.mxu0 0.0
    %143 = vmatpush2.msra.mxu0 %v69
    %144 = vmatprep.subr.mxu0 0.0
    %145 = vmatpush2.msra.mxu0 %v68
    %146 = vmatprep.subr.mxu0 0.0
    %147 = vmatpush2.msra.mxu0 %v67
    %148 = vmatprep.mubr.f32.mxu0 %v73
    %149 = vmatmul.mubr.f32.gmra.mxu0 %v43
    %v150 = vpop.f32.mrf.mxu0
    %v151 = vadd.f32 0.0, %v150
    %v152 = vpop.f32.mrf.mxu0
    %153 = vmatprep.mubr.f32.mxu0 %v76
    %154 = vmatmul.mubr.f32.gmra.mxu0 %v45
    %v155 = vpop.f32.mrf.mxu0
    %v156 = vadd.f32 0.0, %v155
    %v157 = vpop.f32.mrf.mxu0
    %158 = vmatprep.mubr.f32.mxu0 %v79
    %159 = vmatmul.mubr.f32.gmra.mxu0 %v47
    %v160 = vpop.f32.mrf.mxu0
    %v161 = vadd.f32 0.0, %v160
    %v162 = vpop.f32.mrf.mxu0
    %163 = vmatprep.mubr.f32.mxu0 %v82
    %164 = vmatmul.mubr.f32.gmra.mxu0 %v49
    %v165 = vpop.f32.mrf.mxu0
    %v166 = vadd.f32 0.0, %v165
    %v167 = vpop.f32.mrf.mxu0
    %168 = vdwg.mxu0
    %v169 = vmax.f32 %v151, %v156
    %v170 = vrot.slane %v169, 4
    %v171 = vmax.f32 %v169, %v170
    %v172 = vrot.slane %v171, 2
    %v173 = vmax.f32 %v171, %v172
    %v174 = vrot.slane %v173, 1
    %v175 = vmax.f32 %v173, %v174
    %v176 = vmax.f32 %v161, %v166
    %v177 = vrot.slane %v176, 4
    %v178 = vmax.f32 %v176, %v177
    %v179 = vrot.slane %v178, 2
    %v180 = vmax.f32 %v178, %v179
    %v181 = vrot.slane %v180, 1
    %v182 = vmax.f32 %v180, %v181
    %v183 = vld [vmem:[%s2] sm:$0x1]
    %v185 = vlaneseq
    %v186 = vshrl.u32 %v185, 7
    %v187 = vsub.s32 0, %v186
    %v188 = vrot.slane %v183, %v187
    %v190 = vadd.f32 %v175, %v188
    %v191 = vadd.f32 %v182, %v188
    %v192 = vmax.f32 %v190, 0.0
    %v193 = vmax.f32 %v191, 0.0
    %v196 = vrot.slane %v193, 7
    %vm197 = vcmask 1041409
    %v198 = vsel %vm197, %v196, %v192
    %200 = vst [vmem:[#allocation7] sm:$0x3] %v198
    // Predicated region
    $region22: #{tpu_custom_call.1} parent=1 // pred_check
      _
    $region23: #{tpu_custom_call.1} parent=1 // pred_check_branch
      %202 = sbr.rel (0) target = $region25
    $region24: #{tpu_custom_call.1} parent=1 // pred_region
      %s204 = ssub.s32 32, 32
      %205 = vsyncadd [#allocation4], %s204
      %s207 = sshll.u32 [#allocation7], 4
      %s208 = int_to_ptr.vmem [resolvable:$true] %s207
      %210 = dma.vmem_to_hbm [thread:$0]  %s208, 32, %s3, [#allocation4]
    $region25: #{tpu_custom_call.1} parent=1 // pred_fallthru
      _
    // Predicated region
    $region26: #{tpu_custom_call.1} parent=1 // pred_check
      _
    $region27: #{tpu_custom_call.1} parent=1 // pred_check_branch
      %212 = sbr.rel (0) target = $region29
    $region28: #{tpu_custom_call.1} parent=1 // pred_region
      %213 = dma.done [#allocation4], 32
    $region29: #{tpu_custom_call.1} parent=1 // pred_fallthru
      _
    %214 = vsyncpa [#allocation3], 1
    %215 = vsyncpa [#allocation6], 1
    %216 = vsyncpa [#allocation4], 1

</llo_original>
